<compile_context>
chip_gen: v5e
topology: v5e:2x2
jax: 0.10.0
libtpu: 0.0.40
codegen_flags: <defaults>
</compile_context>

<pallas_src>
import functools
import math

import jax
import jax.numpy as jnp
from jax import lax
from jax.experimental import pallas as pl
from jax.experimental.pallas import tpu as pltpu


_EPS = 1e-5


def _layernorm_kernel(x_ref, g_ref, b_ref, o_ref, *, eps):
    # Single pass over the tile: accumulate sum(x) and sum(x*x) together and
    # derive the biased variance as E[x^2] - mean^2.  All math in f32.
    x = x_ref[...].astype(jnp.float32)
    inv_d = 1.0 / x.shape[-1]
    s1 = jnp.sum(x, axis=-1, keepdims=True)
    s2 = jnp.sum(x * x, axis=-1, keepdims=True)
    mean = s1 * inv_d
    var = jnp.maximum(s2 * inv_d - mean * mean, 0.0)   # guard tiny negatives from cancellation
    inv = lax.rsqrt(var + eps)
    g = g_ref[...].astype(jnp.float32)
    b = b_ref[...].astype(jnp.float32)
    o_ref[...] = ((x - mean) * inv * g + b).astype(o_ref.dtype)


def _round_up(x, m):
    return ((x + m - 1) // m) * m


def _chip_config():
    """(vmem_limit_bytes, per-input-tile byte target, row-axis grid semantics)."""
    cap = None
    try:
        cap = int(pltpu.get_tpu_info().vmem_capacity_bytes)
    except Exception:
        cap = None
    if cap is not None and cap >= 100 * 1024 * 1024:
        # v5e / v6e: 128 MiB VMEM per TensorCore -> bigger tiles, generous limit.
        return 64 * 1024 * 1024, 8 * 1024 * 1024, pltpu.PARALLEL
    if cap is not None:
        # v7x-class: 64 MiB physical VMEM per TC, 2 TCs per chip -> smaller
        # tiles and an explicit cross-core split of the row axis.
        return (32 * 1024 * 1024, 4 * 1024 * 1024,
                getattr(pltpu, "CORE_PARALLEL", pltpu.PARALLEL))
    # Unknown chip (query failed): conservative defaults, safe everywhere.
    return 32 * 1024 * 1024, 4 * 1024 * 1024, pltpu.PARALLEL


def _choose_row_tile(m_rows, d, itemsize, tile_target_bytes, sublane):
    tm = tile_target_bytes // max(1, d * itemsize)
    tm = min(tm, _round_up(m_rows, sublane))
    tm = max(sublane, (tm // sublane) * sublane)
    return tm


def layer_norm(x, weight, bias=None, eps=_EPS, block_rows=None):
    """F.layer_norm(x, weight.shape, weight, bias, eps) over the last axis."""
    orig_shape = x.shape
    d = orig_shape[-1]
    m = math.prod(orig_shape[:-1]) if len(orig_shape) > 1 else 1
    x2d = x.reshape(m, d)

    # bias=False path: a zero beta is numerically identical to "no bias add";
    # the extra VPU add is fully hidden under the HBM-bound DMA stream.
    beta = bias if bias is not None else jnp.zeros((d,), weight.dtype)

    vmem_limit, tile_target, row_sem = _chip_config()
    itemsize = jnp.dtype(x.dtype).itemsize
    sublane = max(8, 32 // itemsize)        # 8 for f32, 16 for bf16, 32 for int8/fp8
    if block_rows is not None:
        tm = max(sublane, (int(block_rows) // sublane) * sublane)
        tm = min(tm, _round_up(m, sublane))
    else:
        tm = _choose_row_tile(m, d, itemsize, tile_target, sublane)

    # No padding / no post-slice: the final partial block's OOB reads stay
    # isolated per row and its OOB writes are masked by Pallas.
    grid = (pl.cdiv(m, tm),)
    out = pl.pallas_call(
        functools.partial(_layernorm_kernel, eps=eps),
        grid=grid,
        out_shape=jax.ShapeDtypeStruct((m, d), x.dtype),
        in_specs=[
            pl.BlockSpec((tm, d), lambda i: (i, 0)),   # activations: row-tiled, pipelined
            pl.BlockSpec((1, d), lambda i: (0, 0)),    # gamma: resident across the grid
            pl.BlockSpec((1, d), lambda i: (0, 0)),    # beta:  resident across the grid
        ],
        out_specs=pl.BlockSpec((tm, d), lambda i: (i, 0)),
        compiler_params=pltpu.CompilerParams(
            dimension_semantics=(row_sem,),
            vmem_limit_bytes=vmem_limit,
        ),
    )(x2d, weight.reshape(1, d), beta.reshape(1, d))

    return out.reshape(orig_shape)


def layer_norm_ref(x, weight, bias=None, eps=_EPS):
    xf = x.astype(jnp.float32)
    mean = jnp.mean(xf, axis=-1, keepdims=True)
    xc = xf - mean
    var = jnp.mean(xc * xc, axis=-1, keepdims=True)
    y = xc * lax.rsqrt(var + eps) * weight.astype(jnp.float32)
    if bias is not None:
        y = y + bias.astype(jnp.float32)
    return y.astype(x.dtype)


if __name__ == "__main__":
    key = jax.random.PRNGKey(0)
    k1, k2, k3, k4, k5 = jax.random.split(key, 5)

    # Case 1: shapes implied by the surrounding transformer encoder
    # (batch=2, seq=8, n_embd=32), bias=True.
    B, T, D = 2, 8, 32
    x = jax.random.normal(k1, (B, T, D), dtype=jnp.float32)
    w = 1.0 + 0.02 * jax.random.normal(k2, (D,), dtype=jnp.float32)
    b = 0.02 * jax.random.normal(k3, (D,), dtype=jnp.float32)

    y = jax.block_until_ready(layer_norm(x, w, b))
    y_ref = layer_norm_ref(x, w, b)
    assert y.shape == (B, T, D)
    assert bool(jnp.all(jnp.isfinite(y)))
    assert bool(jnp.allclose(y, y_ref, atol=2e-5, rtol=2e-5))

    # Case 2: bias=False (torch module with bias=False passes bias=None).
    y_nb = jax.block_until_ready(layer_norm(x, w, None))
    assert bool(jnp.allclose(y_nb, layer_norm_ref(x, w, None), atol=2e-5, rtol=2e-5))

    # Case 3: multi-block grid with a *partial* last block (no padding, no
    # post-slice): M=2080 with block_rows=256 -> grid=(9,), last block masked.
    M2, D2 = 2080, 128
    x2 = jax.random.normal(k4, (M2, D2), dtype=jnp.float32)
    w2 = 1.0 + jnp.arange(D2, dtype=jnp.float32) * 1e-3
    b2 = jnp.full((D2,), 0.1, jnp.float32)
    y2 = jax.block_until_ready(layer_norm(x2, w2, b2, block_rows=256))
    assert bool(jnp.allclose(y2, layer_norm_ref(x2, w2, b2), atol=2e-5, rtol=2e-5))

    # Case 4: same inputs with auto (byte-budget) tile sizing -> single big tile.
    y2b = jax.block_until_ready(layer_norm(x2, w2, b2))
    assert bool(jnp.allclose(y2b, layer_norm_ref(x2, w2, b2), atol=2e-5, rtol=2e-5))

    # Case 5: bf16 activations (sublane multiple 16) with a non-tile-multiple
    # row count.
    x3 = jax.random.normal(k5, (24, 128), dtype=jnp.bfloat16)
    w3 = jnp.ones((128,), jnp.float32)
    b3 = jnp.zeros((128,), jnp.float32)
    y3 = jax.block_until_ready(layer_norm(x3, w3, b3))
    assert y3.dtype == jnp.bfloat16
    assert bool(jnp.allclose(y3.astype(jnp.float32),
                             layer_norm_ref(x3, w3, b3).astype(jnp.float32),
                             atol=2e-2, rtol=2e-2))

    print("KERNEL_OK")
</pallas_src>

<mosaic_0001>
module attributes {stable_mosaic.version = 11 : i64} {
  func.func @_layernorm_kernel(%arg0: i32, %arg1: memref<16x32xf32, #tpu.memory_space<vmem>>, %arg2: memref<1x32xf32, #tpu.memory_space<vmem>>, %arg3: memref<1x32xf32, #tpu.memory_space<vmem>>, %arg4: memref<16x32xf32, #tpu.memory_space<vmem>>) attributes {dimension_semantics = [#tpu.dimension_semantics<parallel>], iteration_bounds = array<i64: 1>, scalar_prefetch = 0 : i64, scratch_operands = 0 : i64, tpu.core_type = #tpu.core_type<tc>, window_params = [{transform_indices = @transform_0, window_bounds = array<i64: 16, 32>}, {pipeline_mode = #tpu.pipeline_mode<synchronous>, transform_indices = @transform_1, window_bounds = array<i64: 1, 32>}, {pipeline_mode = #tpu.pipeline_mode<synchronous>, transform_indices = @transform_2, window_bounds = array<i64: 1, 32>}, {transform_indices = @transform_3, window_bounds = array<i64: 16, 32>}]} {
    %c0 = arith.constant 0 : index
    %c0_0 = arith.constant 0 : index
    %0 = vector.load %arg1[%c0, %c0_0] : memref<16x32xf32, #tpu.memory_space<vmem>>, vector<16x32xf32>
    %cst = arith.constant dense<0.000000e+00> : vector<16xf32>
    %1 = vector.multi_reduction <add>, %0, %cst [1] : vector<16x32xf32> to vector<16xf32>
    %2 = vector.shape_cast %1 : vector<16xf32> to vector<16x1xf32>
    %3 = arith.mulf %0, %0 : vector<16x32xf32>
    %cst_1 = arith.constant dense<0.000000e+00> : vector<16xf32>
    %4 = vector.multi_reduction <add>, %3, %cst_1 [1] : vector<16x32xf32> to vector<16xf32>
    %5 = vector.shape_cast %4 : vector<16xf32> to vector<16x1xf32>
    %cst_2 = arith.constant 3.125000e-02 : f32
    %6 = vector.broadcast %cst_2 : f32 to vector<16x1xf32>
    %7 = arith.mulf %2, %6 : vector<16x1xf32>
    %cst_3 = arith.constant 3.125000e-02 : f32
    %8 = vector.broadcast %cst_3 : f32 to vector<16x1xf32>
    %9 = arith.mulf %5, %8 : vector<16x1xf32>
    %10 = arith.mulf %7, %7 : vector<16x1xf32>
    %11 = arith.subf %9, %10 : vector<16x1xf32>
    %cst_4 = arith.constant 0.000000e+00 : f32
    %12 = vector.broadcast %cst_4 : f32 to vector<16x1xf32>
    %13 = arith.maximumf %11, %12 : vector<16x1xf32>
    %cst_5 = arith.constant 9.99999974E-6 : f32
    %14 = vector.broadcast %cst_5 : f32 to vector<16x1xf32>
    %15 = arith.addf %13, %14 : vector<16x1xf32>
    %16 = math.rsqrt %15 : vector<16x1xf32>
    %c0_6 = arith.constant 0 : index
    %c0_7 = arith.constant 0 : index
    %17 = vector.load %arg2[%c0_6, %c0_7] : memref<1x32xf32, #tpu.memory_space<vmem>>, vector<1x32xf32>
    %c0_8 = arith.constant 0 : index
    %c0_9 = arith.constant 0 : index
    %18 = vector.load %arg3[%c0_8, %c0_9] : memref<1x32xf32, #tpu.memory_space<vmem>>, vector<1x32xf32>
    %19 = vector.broadcast %7 : vector<16x1xf32> to vector<16x32xf32>
    %20 = arith.subf %0, %19 : vector<16x32xf32>
    %21 = vector.broadcast %16 : vector<16x1xf32> to vector<16x32xf32>
    %22 = arith.mulf %20, %21 : vector<16x32xf32>
    %23 = vector.broadcast %17 : vector<1x32xf32> to vector<16x32xf32>
    %24 = arith.mulf %22, %23 : vector<16x32xf32>
    %25 = vector.broadcast %18 : vector<1x32xf32> to vector<16x32xf32>
    %26 = arith.addf %24, %25 : vector<16x32xf32>
    %c0_10 = arith.constant 0 : index
    %c0_11 = arith.constant 0 : index
    %27 = vector.load %arg4[%c0_10, %c0_11] : memref<16x32xf32, #tpu.memory_space<vmem>>, vector<16x32xf32>
    tpu.vector_store %arg4[%c0_10, %c0_11], %26 {strides = array<i32>} : memref<16x32xf32, #tpu.memory_space<vmem>>, vector<16x32xf32>,
    return
  }
  func.func @transform_0(%arg0: i32) -> (i32, i32) {
    %c0_i32 = arith.constant 0 : i32
    %c0_i32_0 = arith.constant 0 : i32
    return %arg0, %c0_i32 : i32, i32
  }
  func.func @transform_1(%arg0: i32) -> (i32, i32) {
    %c0_i32 = arith.constant 0 : i32
    %c0_i32_0 = arith.constant 0 : i32
    %c0_i32_1 = arith.constant 0 : i32
    return %c0_i32, %c0_i32_0 : i32, i32
  }
  func.func @transform_2(%arg0: i32) -> (i32, i32) {
    %c0_i32 = arith.constant 0 : i32
    %c0_i32_0 = arith.constant 0 : i32
    %c0_i32_1 = arith.constant 0 : i32
    return %c0_i32, %c0_i32_0 : i32, i32
  }
  func.func @transform_3(%arg0: i32) -> (i32, i32) {
    %c0_i32 = arith.constant 0 : i32
    %c0_i32_0 = arith.constant 0 : i32
    return %arg0, %c0_i32 : i32, i32
  }
}

</mosaic_0001>

<llo_original>
// kernel: tpu_custom_call.1
$region0: #{tpu_custom_call.1}
  #allocation0 [shape = 'u32[]', space=smem, size = 0x4, offset = 0x4, fixed_abs, tag = 'smem constant byte address 0x4 - core index']
  #allocation1 [shape = 'u32[72,128]{1,0:T(1,128)}', space=vmem, size = 0x9000, scoped, tag = 'internal scratch']
  %s0 = inlined_call_operand.hbm [shape: f32[16,32], index: 0, kind: input, shape index: {}]
  %s1 = inlined_call_operand.hbm [shape: f32[1,32], index: 1, kind: input, shape index: {}]
  %s2 = inlined_call_operand.vmem [shape: f32[1,32], index: 2, kind: input, shape index: {}]
  %s3 = inlined_call_operand.hbm [shape: f32[16,32], index: 3, kind: output, shape index: {}]
  %s4 = sld [smem:[#allocation0]]
  $region30: #{tpu_custom_call.1} parent=0
    _
  %s6 = ssub.s32 1, %s4
  %s7 = scalar_select 0, %s6, %s4
  $region1: #{tpu_custom_call.1} parent=0
    #allocation2 [shape = 'u8[8192]{0}', space=vmem, size = 0x2000, scoped, tag = 'input window, operand 0, single buffered']
    #allocation3 [shape = 's32[1]{0}', space=sflag, size = 0x4, scoped, tag = 'scoped memory for tpu_custom_call.1']
    #allocation4 [shape = 's32[1]{0}', space=sflag, size = 0x4, scoped, tag = 'scoped memory for tpu_custom_call.1']
    #allocation5 [shape = 'u8[512]{0}', space=vmem, size = 0x400, scoped, tag = 'input window, operand 1, single buffered']
    #allocation6 [shape = 's32[1]{0}', space=sflag, size = 0x4, scoped, tag = 'scoped memory for tpu_custom_call.1']
    #allocation7 [shape = 'u8[8192]{0}', space=vmem, size = 0x2000, scoped, tag = 'output window, operand 0, single buffered']
    %8 = vsyncpa [#allocation3], 0
    %9 = vsyncpa [#allocation6], 0
    %10 = vsyncpa [#allocation4], 0
    // Predicated region
    $region2: #{tpu_custom_call.1} parent=1 // pred_check
      _
    $region3: #{tpu_custom_call.1} parent=1 // pred_check_branch
      %12 = sbr.rel (0) target = $region5
    $region4: #{tpu_custom_call.1} parent=1 // pred_region
      %14 = vsyncadd [#allocation3], 0
      %s15 = sshll.u32 %s0, 4
      %s16 = int_to_ptr.hbm [resolvable:$true] %s15
      %s17 = sshll.u32 [#allocation2], 4
      %s18 = int_to_ptr.vmem [resolvable:$true] %s17
      %23 = dma.hbm_to_vmem [thread:$0]  %s16, 256, %s18, [#allocation3], 128, 128, 8
    $region5: #{tpu_custom_call.1} parent=1 // pred_fallthru
      _
    // Predicated region
    $region6: #{tpu_custom_call.1} parent=1 // pred_check
      _
    $region7: #{tpu_custom_call.1} parent=1 // pred_check_branch
      %25 = sbr.rel (0) target = $region9
    $region8: #{tpu_custom_call.1} parent=1 // pred_region
      %27 = vsyncadd [#allocation6], 0
      %s29 = sshll.u32 %s1, 4
      %s30 = int_to_ptr.hbm [resolvable:$true] %s29
      %s31 = sshll.u32 [#allocation5], 4
      %s32 = int_to_ptr.vmem [resolvable:$true] %s31
      %34 = dma.hbm_to_vmem [thread:$0]  %s30, 16, %s32, [#allocation6]
    $region9: #{tpu_custom_call.1} parent=1 // pred_fallthru
      _
    // Predicated region
    $region10: #{tpu_custom_call.1} parent=1 // pred_check
      _
    $region11: #{tpu_custom_call.1} parent=1 // pred_check_branch
      %36 = sbr.rel (0) target = $region13
    $region12: #{tpu_custom_call.1} parent=1 // pred_region
      _
    $region13: #{tpu_custom_call.1} parent=1 // pred_fallthru
      _
    // Predicated region
    $region14: #{tpu_custom_call.1} parent=1 // pred_check
      _
    $region15: #{tpu_custom_call.1} parent=1 // pred_check_branch
      %38 = sbr.rel (0) target = $region17
    $region16: #{tpu_custom_call.1} parent=1 // pred_region
      %40 = dma.done [#allocation3], 256
    $region17: #{tpu_custom_call.1} parent=1 // pred_fallthru
      _
    // Predicated region
    $region18: #{tpu_custom_call.1} parent=1 // pred_check
      _
    $region19: #{tpu_custom_call.1} parent=1 // pred_check_branch
      %42 = sbr.rel (0) target = $region21
    $region20: #{tpu_custom_call.1} parent=1 // pred_region
      %44 = dma.done [#allocation6], 16
    $region21: #{tpu_custom_call.1} parent=1 // pred_fallthru
      _
    %v45 = vld [vmem:[#allocation2] sm:$0xff]
    %v46 = vld [vmem:[#allocation2 + $0x8] sm:$0xff]
    %vm47 = vcmask 261120
    %v48 = vsel %vm47, %v45, 0.0
    %49 = vadd.xlane.f32.xlu0 %v48
    %v50 = vpop.xlane.xlu0 %49
    %v51 = vsel %vm47, %v46, 0.0
    %52 = vadd.xlane.f32.xlu0 %v51
    %v53 = vpop.xlane.xlu0 %52
    %v54 = vmul.f32 %v45, %v45
    %v55 = vmul.f32 %v46, %v46
    %v56 = vsel %vm47, %v54, 0.0
    %57 = vadd.xlane.f32.xlu0 %v56
    %v58 = vpop.xlane.xlu0 %57
    %v59 = vsel %vm47, %v55, 0.0
    %60 = vadd.xlane.f32.xlu0 %v59
    %v61 = vpop.xlane.xlu0 %60
    %v62 = vmul.f32 %v50, 0.03125
    %v63 = vmul.f32 %v53, 0.03125
    %v64 = vmul.f32 %v58, 0.03125
    %v65 = vmul.f32 %v61, 0.03125
    %v66 = vmul.f32 %v62, %v62
    %v67 = vmul.f32 %v63, %v63
    %v68 = vsub.f32 %v64, %v66
    %v69 = vsub.f32 %v65, %v67
    %v70 = vmax.f32 %v68, 0.0
    %v71 = vmax.f32 %v69, 0.0
    %v72 = vadd.f32 %v70, 1e-05
    %v73 = vadd.f32 %v71, 1e-05
    %v74 = vrsqrt.pop %v72
    %v75 = vmul.f32 %v74, %v72
    %v76 = vmul.f32 %v75, %v74
    %v77 = vmul.f32 0.5, %v76
    %v78 = vsub.f32 1.5, %v77
    %v79 = vmul.f32 %v74, %v78
    %vm80 = vweird.f32 %v72
    %vm81 = vweird.f32 %v74
    %vm82 = vmor %vm80, %vm81
    %v83 = vsel %vm82, %v74, %v79
    %v84 = vrsqrt.pop %v73
    %v85 = vmul.f32 %v84, %v73
    %v86 = vmul.f32 %v85, %v84
    %v87 = vmul.f32 0.5, %v86
    %v88 = vsub.f32 1.5, %v87
    %v89 = vmul.f32 %v84, %v88
    %vm90 = vweird.f32 %v73
    %vm91 = vweird.f32 %v84
    %vm92 = vmor %vm90, %vm91
    %v93 = vsel %vm92, %v84, %v89
    %v94 = vld [vmem:[#allocation5] sm:$0x1]
    %v95 = vld [vmem:[%s2] sm:$0x1]
    %v96 = vsub.f32 %v45, %v62
    %v97 = vsub.f32 %v46, %v63
    %v98 = vmul.f32 %v96, %v83
    %v99 = vmul.f32 %v97, %v93
    %v101 = vperm.slane %v94, 0
    %v103 = vmul.f32 %v98, %v101
    %v104 = vmul.f32 %v99, %v101
    %v106 = vperm.slane %v95, 0
    %v108 = vadd.f32 %v103, %v106
    %v109 = vadd.f32 %v104, %v106
    %110 = vst.msk [vmem:[#allocation7] sm:$0xff] %vm47, %v108
    %111 = vst.msk [vmem:[#allocation7 + $0x8] sm:$0xff] %vm47, %v109
    // Predicated region
    $region22: #{tpu_custom_call.1} parent=1 // pred_check
      _
    $region23: #{tpu_custom_call.1} parent=1 // pred_check_branch
      %113 = sbr.rel (0) target = $region25
    $region24: #{tpu_custom_call.1} parent=1 // pred_region
      %115 = vsyncadd [#allocation4], 0
      %s116 = sshll.u32 [#allocation7], 4
      %s117 = int_to_ptr.vmem [resolvable:$true] %s116
      %s118 = sshll.u32 %s3, 4
      %s119 = int_to_ptr.hbm [resolvable:$true] %s118
      %124 = dma.vmem_to_hbm [thread:$0]  %s117, 256, %s119, [#allocation4], 128, 128, 8
    $region25: #{tpu_custom_call.1} parent=1 // pred_fallthru
      _
    // Predicated region
    $region26: #{tpu_custom_call.1} parent=1 // pred_check
      _
    $region27: #{tpu_custom_call.1} parent=1 // pred_check_branch
      %126 = sbr.rel (0) target = $region29
    $region28: #{tpu_custom_call.1} parent=1 // pred_region
      %128 = dma.done [#allocation4], 256
    $region29: #{tpu_custom_call.1} parent=1 // pred_fallthru
      _
    %129 = vsyncpa [#allocation3], 1
    %130 = vsyncpa [#allocation6], 1
    %131 = vsyncpa [#allocation4], 1

</llo_original>
